<compile_context>
chip_gen: v7x
topology: tpu7x:2x2x1
jax: 0.10.0
libtpu: 0.0.40
codegen_flags: <defaults>
</compile_context>

<pallas_src>
import jax
import jax.numpy as jnp
from jax.experimental import pallas as pl
from jax.experimental.pallas import tpu as pltpu

_LANE = 128  # pad the fused head output to a multiple of the lane width


# ---------------------------------------------------------------------------
# Fused kernel:
#   cls    = word_emb[word_ids[:,0]] + seg_emb[seg_ids[:,0]]     (DMA gather)
#   pooled = tanh(cls @ Wp + bp)
#   out    = pooled @ Wh_flat + bh_flat                          (all T heads)
# ---------------------------------------------------------------------------
def _bert_spc_fused_kernel(word_ids_ref,   # SMEM (B, L) int32
                           seg_ids_ref,    # VMEM (B, L) int32
                           word_emb_hbm,   # ANY  (vocab, H) f32
                           seg_emb_ref,    # VMEM (2, H) f32
                           wp_ref,         # VMEM (H, H) bf16
                           bp_ref,         # VMEM (1, H) f32
                           wh_ref,         # VMEM (H, Npad) bf16
                           bh_ref,         # VMEM (1, Npad) f32
                           out_ref,        # VMEM (B, Npad) f32
                           cls_buf,        # VMEM scratch (B, H) f32
                           copy_sems):     # DMA sems (B,)
    B = cls_buf.shape[0]

    # --- [CLS] word-embedding gather: one small row DMA per batch element --
    copies = []
    for b in range(B):                      # B is small & static -> unrolled
        row = word_ids_ref[b, 0]            # scalar token id from SMEM
        cp = pltpu.make_async_copy(
            word_emb_hbm.at[pl.ds(row, 1), :],   # (1, H) HBM row
            cls_buf.at[pl.ds(b, 1), :],          # (1, H) VMEM row
            copy_sems.at[b])
        cp.start()
        copies.append(cp)
    for cp in copies:
        cp.wait()

    # --- segment embedding: ids are 0/1 -> arithmetic 2-way blend ----------
    seg0 = seg_emb_ref[0:1, :]                              # (1, H)
    seg1 = seg_emb_ref[1:2, :]                              # (1, H)
    w = seg_ids_ref[:, 0:1].astype(jnp.float32)             # (B, 1) in {0,1}
    cls = cls_buf[...] + (seg0 + w * (seg1 - seg0))         # (B, H) f32

    # Dropout: identity at inference time (no-op).

    # --- pooler: bf16 operands, f32 accumulation; tanh/bias stay in f32 ----
    pooled = jnp.tanh(
        jnp.dot(cls.astype(jnp.bfloat16), wp_ref[...],
                preferred_element_type=jnp.float32) + bp_ref[...])

    # --- all taskcla heads as ONE matmul against the flattened weight slab -
    logits = jnp.dot(pooled.astype(jnp.bfloat16), wh_ref[...],
                     preferred_element_type=jnp.float32) + bh_ref[...]
    out_ref[...] = logits.astype(out_ref.dtype)   # lane-dense (B, Npad) store


# ---------------------------------------------------------------------------
# One-time parameter preparation (hoisted out of the per-call forward path)
# ---------------------------------------------------------------------------
def prepare_params(raw):
    """Flatten/pad/cast weights once; keep them bf16 at rest for the MXU."""
    H = raw["w_pool"].shape[0]
    T, _, P = raw["w_heads"].shape
    n = T * P
    n_pad = max(_LANE, pl.cdiv(n, _LANE) * _LANE)

    wh = jnp.transpose(raw["w_heads"], (1, 0, 2)).reshape(H, n)
    wh = jnp.pad(wh, ((0, 0), (0, n_pad - n)))
    bh = jnp.pad(raw["b_heads"].reshape(1, n), ((0, 0), (0, n_pad - n)))

    return dict(
        word_emb=raw["word_emb"].astype(jnp.float32),        # (vocab, H), HBM
        seg_emb=raw["seg_emb"].astype(jnp.float32),           # (2, H)
        w_pool=raw["w_pool"].astype(jnp.bfloat16),             # (H, H) bf16
        b_pool=raw["b_pool"].reshape(1, H).astype(jnp.float32),
        w_heads_flat=wh.astype(jnp.bfloat16),                  # (H, Npad) bf16
        b_heads_flat=bh.astype(jnp.float32),                   # (1, Npad)
        taskcla=T, polarities_dim=P, n_logits=n, n_pad=n_pad, hidden=H,
    )


# ---------------------------------------------------------------------------
# Full BERT_SPC forward (single fused pallas_call)
# ---------------------------------------------------------------------------
def bert_spc_forward(prep, t, inputs, s):
    """Mirrors BERT_SPC.forward(t, inputs, s): returns list of (B, P) logits."""
    del t, s  # unused on the non-HAT path, kept for signature fidelity
    text_bert_indices, bert_segments_ids = inputs[0], inputs[1]
    B = text_bert_indices.shape[0]
    H = prep["hidden"]
    n_pad = prep["n_pad"]

    smem = pl.BlockSpec(memory_space=pltpu.MemorySpace.SMEM)
    vmem = pl.BlockSpec(memory_space=pltpu.MemorySpace.VMEM)
    hbm = pl.BlockSpec(memory_space=pl.ANY)   # embedding table stays in HBM

    y_flat = pl.pallas_call(
        _bert_spc_fused_kernel,
        out_shape=jax.ShapeDtypeStruct((B, n_pad), jnp.float32),
        in_specs=[smem, vmem, hbm, vmem, vmem, vmem, vmem, vmem],
        out_specs=vmem,
        scratch_shapes=[pltpu.VMEM((B, H), jnp.float32),
                        pltpu.SemaphoreType.DMA((B,))],
    )(text_bert_indices.astype(jnp.int32),
      bert_segments_ids.astype(jnp.int32),
      prep["word_emb"], prep["seg_emb"],
      prep["w_pool"], prep["b_pool"],
      prep["w_heads_flat"], prep["b_heads_flat"])

    T, P, n = prep["taskcla"], prep["polarities_dim"], prep["n_logits"]
    y3 = y_flat[:, :n].reshape(B, T, P)
    # Match the PyTorch module: a list with one (B, P) logits tensor per task.
    return [y3[:, i, :] for i in range(T)]


if __name__ == "__main__":
    # Small, forward-consistent shapes.
    batch = 8
    seq_len = 16
    bert_dim = 32          # opt.bert_dim
    polarities_dim = 4     # opt.polarities_dim
    taskcla = 3            # opt.taskcla
    vocab = 64

    key = jax.random.PRNGKey(0)
    k = jax.random.split(key, 8)

    raw_params = {
        "word_emb": jax.random.normal(k[0], (vocab, bert_dim), jnp.float32) * 0.02,
        "seg_emb":  jax.random.normal(k[1], (2, bert_dim), jnp.float32) * 0.02,
        "w_pool":   jax.random.normal(k[2], (bert_dim, bert_dim), jnp.float32) * 0.05,
        "b_pool":   jax.random.normal(k[3], (bert_dim,), jnp.float32) * 0.01,
        "w_heads":  jax.random.normal(k[4], (taskcla, bert_dim, polarities_dim),
                                      jnp.float32) * 0.05,
        "b_heads":  jax.random.normal(k[5], (taskcla, polarities_dim),
                                      jnp.float32) * 0.01,
    }
    prep = prepare_params(raw_params)

    text_bert_indices = jax.random.randint(k[6], (batch, seq_len), 0, vocab,
                                           dtype=jnp.int32)
    bert_segments_ids = jax.random.randint(k[7], (batch, seq_len), 0, 2,
                                           dtype=jnp.int32)

    y = bert_spc_forward(prep, 0, (text_bert_indices, bert_segments_ids), 1.0)
    y = jax.block_until_ready(y)
    assert len(y) == taskcla and y[0].shape == (batch, polarities_dim)

    # Pure-JAX f32 reference (kernel uses bf16 weights/operands with f32
    # accumulation -> use bf16-appropriate tolerances).
    cls_ref = (raw_params["word_emb"][text_bert_indices[:, 0]]
               + raw_params["seg_emb"][bert_segments_ids[:, 0]])
    pooled_ref = jnp.tanh(cls_ref @ raw_params["w_pool"] + raw_params["b_pool"])
    ok = True
    for ti in range(taskcla):
        ref_t = pooled_ref @ raw_params["w_heads"][ti] + raw_params["b_heads"][ti]
        ok = ok and bool(jnp.allclose(y[ti], ref_t, atol=2e-3, rtol=2e-2))

    if ok:
        print("KERNEL_OK")
</pallas_src>

<mosaic_0001>
module attributes {stable_mosaic.version = 11 : i64} {
  func.func @_bert_spc_fused_kernel(%arg0: memref<8x16xi32, #tpu.memory_space<smem>>, %arg1: memref<8x16xi32, #tpu.memory_space<vmem>>, %arg2: memref<64x32xf32, #tpu.memory_space<any>>, %arg3: memref<2x32xf32, #tpu.memory_space<vmem>>, %arg4: memref<32x32xbf16, #tpu.memory_space<vmem>>, %arg5: memref<1x32xf32, #tpu.memory_space<vmem>>, %arg6: memref<32x128xbf16, #tpu.memory_space<vmem>>, %arg7: memref<1x128xf32, #tpu.memory_space<vmem>>, %arg8: memref<8x128xf32, #tpu.memory_space<vmem>>, %arg9: memref<8x32xf32, #tpu.memory_space<vmem>>, %arg10: memref<8x!tpu.dma_semaphore, #tpu.memory_space<semaphore_mem>>) attributes {dimension_semantics = [], scalar_prefetch = 0 : i64, scratch_operands = 2 : i64, tpu.core_type = #tpu.core_type<tc>} {
    %c0 = arith.constant 0 : index
    %c0_0 = arith.constant 0 : index
    %0 = memref.load %arg0[%c0, %c0_0] : memref<8x16xi32, #tpu.memory_space<smem>>
    %c0_i32 = arith.constant 0 : i32
    %c0_i32_1 = arith.constant 0 : i32
    %1 = tpu.memref_slice %arg2[%0, %c0_i32_1] : memref<64x32xf32, #tpu.memory_space<any>> -> memref<1x32xf32, #tpu.memory_space<any>>
    %c0_i32_2 = arith.constant 0 : i32
    %c0_i32_3 = arith.constant 0 : i32
    %2 = tpu.memref_slice %arg9[%c0_i32_2, %c0_i32_3] : memref<8x32xf32, #tpu.memory_space<vmem>> -> memref<1x32xf32, #tpu.memory_space<vmem>>
    %3 = tpu.memref_slice %arg10[%c0_i32] : memref<8x!tpu.dma_semaphore, #tpu.memory_space<semaphore_mem>> -> memref<1x!tpu.dma_semaphore, #tpu.memory_space<semaphore_mem>>
    %4 = tpu.memref_squeeze %3 : memref<1x!tpu.dma_semaphore, #tpu.memory_space<semaphore_mem>> -> memref<!tpu.dma_semaphore, #tpu.memory_space<semaphore_mem>>
    tpu.enqueue_dma source(%1 : memref<1x32xf32, #tpu.memory_space<any>>) target(%2 : memref<1x32xf32, #tpu.memory_space<vmem>>) target_semaphore(%4 : memref<!tpu.dma_semaphore, #tpu.memory_space<semaphore_mem>>)
    %c1 = arith.constant 1 : index
    %c0_4 = arith.constant 0 : index
    %5 = memref.load %arg0[%c1, %c0_4] : memref<8x16xi32, #tpu.memory_space<smem>>
    %c1_i32 = arith.constant 1 : i32
    %c0_i32_5 = arith.constant 0 : i32
    %6 = tpu.memref_slice %arg2[%5, %c0_i32_5] : memref<64x32xf32, #tpu.memory_space<any>> -> memref<1x32xf32, #tpu.memory_space<any>>
    %c1_i32_6 = arith.constant 1 : i32
    %c0_i32_7 = arith.constant 0 : i32
    %7 = tpu.memref_slice %arg9[%c1_i32_6, %c0_i32_7] : memref<8x32xf32, #tpu.memory_space<vmem>> -> memref<1x32xf32, #tpu.memory_space<vmem>>
    %8 = tpu.memref_slice %arg10[%c1_i32] : memref<8x!tpu.dma_semaphore, #tpu.memory_space<semaphore_mem>> -> memref<1x!tpu.dma_semaphore, #tpu.memory_space<semaphore_mem>>
    %9 = tpu.memref_squeeze %8 : memref<1x!tpu.dma_semaphore, #tpu.memory_space<semaphore_mem>> -> memref<!tpu.dma_semaphore, #tpu.memory_space<semaphore_mem>>
    tpu.enqueue_dma source(%6 : memref<1x32xf32, #tpu.memory_space<any>>) target(%7 : memref<1x32xf32, #tpu.memory_space<vmem>>) target_semaphore(%9 : memref<!tpu.dma_semaphore, #tpu.memory_space<semaphore_mem>>)
    %c2 = arith.constant 2 : index
    %c0_8 = arith.constant 0 : index
    %10 = memref.load %arg0[%c2, %c0_8] : memref<8x16xi32, #tpu.memory_space<smem>>
    %c2_i32 = arith.constant 2 : i32
    %c0_i32_9 = arith.constant 0 : i32
    %11 = tpu.memref_slice %arg2[%10, %c0_i32_9] : memref<64x32xf32, #tpu.memory_space<any>> -> memref<1x32xf32, #tpu.memory_space<any>>
    %c2_i32_10 = arith.constant 2 : i32
    %c0_i32_11 = arith.constant 0 : i32
    %12 = tpu.memref_slice %arg9[%c2_i32_10, %c0_i32_11] : memref<8x32xf32, #tpu.memory_space<vmem>> -> memref<1x32xf32, #tpu.memory_space<vmem>>
    %13 = tpu.memref_slice %arg10[%c2_i32] : memref<8x!tpu.dma_semaphore, #tpu.memory_space<semaphore_mem>> -> memref<1x!tpu.dma_semaphore, #tpu.memory_space<semaphore_mem>>
    %14 = tpu.memref_squeeze %13 : memref<1x!tpu.dma_semaphore, #tpu.memory_space<semaphore_mem>> -> memref<!tpu.dma_semaphore, #tpu.memory_space<semaphore_mem>>
    tpu.enqueue_dma source(%11 : memref<1x32xf32, #tpu.memory_space<any>>) target(%12 : memref<1x32xf32, #tpu.memory_space<vmem>>) target_semaphore(%14 : memref<!tpu.dma_semaphore, #tpu.memory_space<semaphore_mem>>)
    %c3 = arith.constant 3 : index
    %c0_12 = arith.constant 0 : index
    %15 = memref.load %arg0[%c3, %c0_12] : memref<8x16xi32, #tpu.memory_space<smem>>
    %c3_i32 = arith.constant 3 : i32
    %c0_i32_13 = arith.constant 0 : i32
    %16 = tpu.memref_slice %arg2[%15, %c0_i32_13] : memref<64x32xf32, #tpu.memory_space<any>> -> memref<1x32xf32, #tpu.memory_space<any>>
    %c3_i32_14 = arith.constant 3 : i32
    %c0_i32_15 = arith.constant 0 : i32
    %17 = tpu.memref_slice %arg9[%c3_i32_14, %c0_i32_15] : memref<8x32xf32, #tpu.memory_space<vmem>> -> memref<1x32xf32, #tpu.memory_space<vmem>>
    %18 = tpu.memref_slice %arg10[%c3_i32] : memref<8x!tpu.dma_semaphore, #tpu.memory_space<semaphore_mem>> -> memref<1x!tpu.dma_semaphore, #tpu.memory_space<semaphore_mem>>
    %19 = tpu.memref_squeeze %18 : memref<1x!tpu.dma_semaphore, #tpu.memory_space<semaphore_mem>> -> memref<!tpu.dma_semaphore, #tpu.memory_space<semaphore_mem>>
    tpu.enqueue_dma source(%16 : memref<1x32xf32, #tpu.memory_space<any>>) target(%17 : memref<1x32xf32, #tpu.memory_space<vmem>>) target_semaphore(%19 : memref<!tpu.dma_semaphore, #tpu.memory_space<semaphore_mem>>)
    %c4 = arith.constant 4 : index
    %c0_16 = arith.constant 0 : index
    %20 = memref.load %arg0[%c4, %c0_16] : memref<8x16xi32, #tpu.memory_space<smem>>
    %c4_i32 = arith.constant 4 : i32
    %c0_i32_17 = arith.constant 0 : i32
    %21 = tpu.memref_slice %arg2[%20, %c0_i32_17] : memref<64x32xf32, #tpu.memory_space<any>> -> memref<1x32xf32, #tpu.memory_space<any>>
    %c4_i32_18 = arith.constant 4 : i32
    %c0_i32_19 = arith.constant 0 : i32
    %22 = tpu.memref_slice %arg9[%c4_i32_18, %c0_i32_19] : memref<8x32xf32, #tpu.memory_space<vmem>> -> memref<1x32xf32, #tpu.memory_space<vmem>>
    %23 = tpu.memref_slice %arg10[%c4_i32] : memref<8x!tpu.dma_semaphore, #tpu.memory_space<semaphore_mem>> -> memref<1x!tpu.dma_semaphore, #tpu.memory_space<semaphore_mem>>
    %24 = tpu.memref_squeeze %23 : memref<1x!tpu.dma_semaphore, #tpu.memory_space<semaphore_mem>> -> memref<!tpu.dma_semaphore, #tpu.memory_space<semaphore_mem>>
    tpu.enqueue_dma source(%21 : memref<1x32xf32, #tpu.memory_space<any>>) target(%22 : memref<1x32xf32, #tpu.memory_space<vmem>>) target_semaphore(%24 : memref<!tpu.dma_semaphore, #tpu.memory_space<semaphore_mem>>)
    %c5 = arith.constant 5 : index
    %c0_20 = arith.constant 0 : index
    %25 = memref.load %arg0[%c5, %c0_20] : memref<8x16xi32, #tpu.memory_space<smem>>
    %c5_i32 = arith.constant 5 : i32
    %c0_i32_21 = arith.constant 0 : i32
    %26 = tpu.memref_slice %arg2[%25, %c0_i32_21] : memref<64x32xf32, #tpu.memory_space<any>> -> memref<1x32xf32, #tpu.memory_space<any>>
    %c5_i32_22 = arith.constant 5 : i32
    %c0_i32_23 = arith.constant 0 : i32
    %27 = tpu.memref_slice %arg9[%c5_i32_22, %c0_i32_23] : memref<8x32xf32, #tpu.memory_space<vmem>> -> memref<1x32xf32, #tpu.memory_space<vmem>>
    %28 = tpu.memref_slice %arg10[%c5_i32] : memref<8x!tpu.dma_semaphore, #tpu.memory_space<semaphore_mem>> -> memref<1x!tpu.dma_semaphore, #tpu.memory_space<semaphore_mem>>
    %29 = tpu.memref_squeeze %28 : memref<1x!tpu.dma_semaphore, #tpu.memory_space<semaphore_mem>> -> memref<!tpu.dma_semaphore, #tpu.memory_space<semaphore_mem>>
    tpu.enqueue_dma source(%26 : memref<1x32xf32, #tpu.memory_space<any>>) target(%27 : memref<1x32xf32, #tpu.memory_space<vmem>>) target_semaphore(%29 : memref<!tpu.dma_semaphore, #tpu.memory_space<semaphore_mem>>)
    %c6 = arith.constant 6 : index
    %c0_24 = arith.constant 0 : index
    %30 = memref.load %arg0[%c6, %c0_24] : memref<8x16xi32, #tpu.memory_space<smem>>
    %c6_i32 = arith.constant 6 : i32
    %c0_i32_25 = arith.constant 0 : i32
    %31 = tpu.memref_slice %arg2[%30, %c0_i32_25] : memref<64x32xf32, #tpu.memory_space<any>> -> memref<1x32xf32, #tpu.memory_space<any>>
    %c6_i32_26 = arith.constant 6 : i32
    %c0_i32_27 = arith.constant 0 : i32
    %32 = tpu.memref_slice %arg9[%c6_i32_26, %c0_i32_27] : memref<8x32xf32, #tpu.memory_space<vmem>> -> memref<1x32xf32, #tpu.memory_space<vmem>>
    %33 = tpu.memref_slice %arg10[%c6_i32] : memref<8x!tpu.dma_semaphore, #tpu.memory_space<semaphore_mem>> -> memref<1x!tpu.dma_semaphore, #tpu.memory_space<semaphore_mem>>
    %34 = tpu.memref_squeeze %33 : memref<1x!tpu.dma_semaphore, #tpu.memory_space<semaphore_mem>> -> memref<!tpu.dma_semaphore, #tpu.memory_space<semaphore_mem>>
    tpu.enqueue_dma source(%31 : memref<1x32xf32, #tpu.memory_space<any>>) target(%32 : memref<1x32xf32, #tpu.memory_space<vmem>>) target_semaphore(%34 : memref<!tpu.dma_semaphore, #tpu.memory_space<semaphore_mem>>)
    %c7 = arith.constant 7 : index
    %c0_28 = arith.constant 0 : index
    %35 = memref.load %arg0[%c7, %c0_28] : memref<8x16xi32, #tpu.memory_space<smem>>
    %c7_i32 = arith.constant 7 : i32
    %c0_i32_29 = arith.constant 0 : i32
    %36 = tpu.memref_slice %arg2[%35, %c0_i32_29] : memref<64x32xf32, #tpu.memory_space<any>> -> memref<1x32xf32, #tpu.memory_space<any>>
    %c7_i32_30 = arith.constant 7 : i32
    %c0_i32_31 = arith.constant 0 : i32
    %37 = tpu.memref_slice %arg9[%c7_i32_30, %c0_i32_31] : memref<8x32xf32, #tpu.memory_space<vmem>> -> memref<1x32xf32, #tpu.memory_space<vmem>>
    %38 = tpu.memref_slice %arg10[%c7_i32] : memref<8x!tpu.dma_semaphore, #tpu.memory_space<semaphore_mem>> -> memref<1x!tpu.dma_semaphore, #tpu.memory_space<semaphore_mem>>
    %39 = tpu.memref_squeeze %38 : memref<1x!tpu.dma_semaphore, #tpu.memory_space<semaphore_mem>> -> memref<!tpu.dma_semaphore, #tpu.memory_space<semaphore_mem>>
    tpu.enqueue_dma source(%36 : memref<1x32xf32, #tpu.memory_space<any>>) target(%37 : memref<1x32xf32, #tpu.memory_space<vmem>>) target_semaphore(%39 : memref<!tpu.dma_semaphore, #tpu.memory_space<semaphore_mem>>)
    %c0_i32_32 = arith.constant 0 : i32
    %c0_i32_33 = arith.constant 0 : i32
    %40 = tpu.memref_slice %arg2[%0, %c0_i32_33] : memref<64x32xf32, #tpu.memory_space<any>> -> memref<1x32xf32, #tpu.memory_space<any>>
    %c0_i32_34 = arith.constant 0 : i32
    %c0_i32_35 = arith.constant 0 : i32
    %41 = tpu.memref_slice %arg9[%c0_i32_34, %c0_i32_35] : memref<8x32xf32, #tpu.memory_space<vmem>> -> memref<1x32xf32, #tpu.memory_space<vmem>>
    %42 = tpu.memref_slice %arg10[%c0_i32_32] : memref<8x!tpu.dma_semaphore, #tpu.memory_space<semaphore_mem>> -> memref<1x!tpu.dma_semaphore, #tpu.memory_space<semaphore_mem>>
    %43 = tpu.memref_squeeze %42 : memref<1x!tpu.dma_semaphore, #tpu.memory_space<semaphore_mem>> -> memref<!tpu.dma_semaphore, #tpu.memory_space<semaphore_mem>>
    tpu.wait_dma2 semaphore(%43 : memref<!tpu.dma_semaphore, #tpu.memory_space<semaphore_mem>>) src(%40 : memref<1x32xf32, #tpu.memory_space<any>>) dst(%41 : memref<1x32xf32, #tpu.memory_space<vmem>>)
    %c1_i32_36 = arith.constant 1 : i32
    %c0_i32_37 = arith.constant 0 : i32
    %44 = tpu.memref_slice %arg2[%5, %c0_i32_37] : memref<64x32xf32, #tpu.memory_space<any>> -> memref<1x32xf32, #tpu.memory_space<any>>
    %c1_i32_38 = arith.constant 1 : i32
    %c0_i32_39 = arith.constant 0 : i32
    %45 = tpu.memref_slice %arg9[%c1_i32_38, %c0_i32_39] : memref<8x32xf32, #tpu.memory_space<vmem>> -> memref<1x32xf32, #tpu.memory_space<vmem>>
    %46 = tpu.memref_slice %arg10[%c1_i32_36] : memref<8x!tpu.dma_semaphore, #tpu.memory_space<semaphore_mem>> -> memref<1x!tpu.dma_semaphore, #tpu.memory_space<semaphore_mem>>
    %47 = tpu.memref_squeeze %46 : memref<1x!tpu.dma_semaphore, #tpu.memory_space<semaphore_mem>> -> memref<!tpu.dma_semaphore, #tpu.memory_space<semaphore_mem>>
    tpu.wait_dma2 semaphore(%47 : memref<!tpu.dma_semaphore, #tpu.memory_space<semaphore_mem>>) src(%44 : memref<1x32xf32, #tpu.memory_space<any>>) dst(%45 : memref<1x32xf32, #tpu.memory_space<vmem>>)
    %c2_i32_40 = arith.constant 2 : i32
    %c0_i32_41 = arith.constant 0 : i32
    %48 = tpu.memref_slice %arg2[%10, %c0_i32_41] : memref<64x32xf32, #tpu.memory_space<any>> -> memref<1x32xf32, #tpu.memory_space<any>>
    %c2_i32_42 = arith.constant 2 : i32
    %c0_i32_43 = arith.constant 0 : i32
    %49 = tpu.memref_slice %arg9[%c2_i32_42, %c0_i32_43] : memref<8x32xf32, #tpu.memory_space<vmem>> -> memref<1x32xf32, #tpu.memory_space<vmem>>
    %50 = tpu.memref_slice %arg10[%c2_i32_40] : memref<8x!tpu.dma_semaphore, #tpu.memory_space<semaphore_mem>> -> memref<1x!tpu.dma_semaphore, #tpu.memory_space<semaphore_mem>>
    %51 = tpu.memref_squeeze %50 : memref<1x!tpu.dma_semaphore, #tpu.memory_space<semaphore_mem>> -> memref<!tpu.dma_semaphore, #tpu.memory_space<semaphore_mem>>
    tpu.wait_dma2 semaphore(%51 : memref<!tpu.dma_semaphore, #tpu.memory_space<semaphore_mem>>) src(%48 : memref<1x32xf32, #tpu.memory_space<any>>) dst(%49 : memref<1x32xf32, #tpu.memory_space<vmem>>)
    %c3_i32_44 = arith.constant 3 : i32
    %c0_i32_45 = arith.constant 0 : i32
    %52 = tpu.memref_slice %arg2[%15, %c0_i32_45] : memref<64x32xf32, #tpu.memory_space<any>> -> memref<1x32xf32, #tpu.memory_space<any>>
    %c3_i32_46 = arith.constant 3 : i32
    %c0_i32_47 = arith.constant 0 : i32
    %53 = tpu.memref_slice %arg9[%c3_i32_46, %c0_i32_47] : memref<8x32xf32, #tpu.memory_space<vmem>> -> memref<1x32xf32, #tpu.memory_space<vmem>>
    %54 = tpu.memref_slice %arg10[%c3_i32_44] : memref<8x!tpu.dma_semaphore, #tpu.memory_space<semaphore_mem>> -> memref<1x!tpu.dma_semaphore, #tpu.memory_space<semaphore_mem>>
    %55 = tpu.memref_squeeze %54 : memref<1x!tpu.dma_semaphore, #tpu.memory_space<semaphore_mem>> -> memref<!tpu.dma_semaphore, #tpu.memory_space<semaphore_mem>>
    tpu.wait_dma2 semaphore(%55 : memref<!tpu.dma_semaphore, #tpu.memory_space<semaphore_mem>>) src(%52 : memref<1x32xf32, #tpu.memory_space<any>>) dst(%53 : memref<1x32xf32, #tpu.memory_space<vmem>>)
    %c4_i32_48 = arith.constant 4 : i32
    %c0_i32_49 = arith.constant 0 : i32
    %56 = tpu.memref_slice %arg2[%20, %c0_i32_49] : memref<64x32xf32, #tpu.memory_space<any>> -> memref<1x32xf32, #tpu.memory_space<any>>
    %c4_i32_50 = arith.constant 4 : i32
    %c0_i32_51 = arith.constant 0 : i32
    %57 = tpu.memref_slice %arg9[%c4_i32_50, %c0_i32_51] : memref<8x32xf32, #tpu.memory_space<vmem>> -> memref<1x32xf32, #tpu.memory_space<vmem>>
    %58 = tpu.memref_slice %arg10[%c4_i32_48] : memref<8x!tpu.dma_semaphore, #tpu.memory_space<semaphore_mem>> -> memref<1x!tpu.dma_semaphore, #tpu.memory_space<semaphore_mem>>
    %59 = tpu.memref_squeeze %58 : memref<1x!tpu.dma_semaphore, #tpu.memory_space<semaphore_mem>> -> memref<!tpu.dma_semaphore, #tpu.memory_space<semaphore_mem>>
    tpu.wait_dma2 semaphore(%59 : memref<!tpu.dma_semaphore, #tpu.memory_space<semaphore_mem>>) src(%56 : memref<1x32xf32, #tpu.memory_space<any>>) dst(%57 : memref<1x32xf32, #tpu.memory_space<vmem>>)
    %c5_i32_52 = arith.constant 5 : i32
    %c0_i32_53 = arith.constant 0 : i32
    %60 = tpu.memref_slice %arg2[%25, %c0_i32_53] : memref<64x32xf32, #tpu.memory_space<any>> -> memref<1x32xf32, #tpu.memory_space<any>>
    %c5_i32_54 = arith.constant 5 : i32
    %c0_i32_55 = arith.constant 0 : i32
    %61 = tpu.memref_slice %arg9[%c5_i32_54, %c0_i32_55] : memref<8x32xf32, #tpu.memory_space<vmem>> -> memref<1x32xf32, #tpu.memory_space<vmem>>
    %62 = tpu.memref_slice %arg10[%c5_i32_52] : memref<8x!tpu.dma_semaphore, #tpu.memory_space<semaphore_mem>> -> memref<1x!tpu.dma_semaphore, #tpu.memory_space<semaphore_mem>>
    %63 = tpu.memref_squeeze %62 : memref<1x!tpu.dma_semaphore, #tpu.memory_space<semaphore_mem>> -> memref<!tpu.dma_semaphore, #tpu.memory_space<semaphore_mem>>
    tpu.wait_dma2 semaphore(%63 : memref<!tpu.dma_semaphore, #tpu.memory_space<semaphore_mem>>) src(%60 : memref<1x32xf32, #tpu.memory_space<any>>) dst(%61 : memref<1x32xf32, #tpu.memory_space<vmem>>)
    %c6_i32_56 = arith.constant 6 : i32
    %c0_i32_57 = arith.constant 0 : i32
    %64 = tpu.memref_slice %arg2[%30, %c0_i32_57] : memref<64x32xf32, #tpu.memory_space<any>> -> memref<1x32xf32, #tpu.memory_space<any>>
    %c6_i32_58 = arith.constant 6 : i32
    %c0_i32_59 = arith.constant 0 : i32
    %65 = tpu.memref_slice %arg9[%c6_i32_58, %c0_i32_59] : memref<8x32xf32, #tpu.memory_space<vmem>> -> memref<1x32xf32, #tpu.memory_space<vmem>>
    %66 = tpu.memref_slice %arg10[%c6_i32_56] : memref<8x!tpu.dma_semaphore, #tpu.memory_space<semaphore_mem>> -> memref<1x!tpu.dma_semaphore, #tpu.memory_space<semaphore_mem>>
    %67 = tpu.memref_squeeze %66 : memref<1x!tpu.dma_semaphore, #tpu.memory_space<semaphore_mem>> -> memref<!tpu.dma_semaphore, #tpu.memory_space<semaphore_mem>>
    tpu.wait_dma2 semaphore(%67 : memref<!tpu.dma_semaphore, #tpu.memory_space<semaphore_mem>>) src(%64 : memref<1x32xf32, #tpu.memory_space<any>>) dst(%65 : memref<1x32xf32, #tpu.memory_space<vmem>>)
    %c7_i32_60 = arith.constant 7 : i32
    %c0_i32_61 = arith.constant 0 : i32
    %68 = tpu.memref_slice %arg2[%35, %c0_i32_61] : memref<64x32xf32, #tpu.memory_space<any>> -> memref<1x32xf32, #tpu.memory_space<any>>
    %c7_i32_62 = arith.constant 7 : i32
    %c0_i32_63 = arith.constant 0 : i32
    %69 = tpu.memref_slice %arg9[%c7_i32_62, %c0_i32_63] : memref<8x32xf32, #tpu.memory_space<vmem>> -> memref<1x32xf32, #tpu.memory_space<vmem>>
    %70 = tpu.memref_slice %arg10[%c7_i32_60] : memref<8x!tpu.dma_semaphore, #tpu.memory_space<semaphore_mem>> -> memref<1x!tpu.dma_semaphore, #tpu.memory_space<semaphore_mem>>
    %71 = tpu.memref_squeeze %70 : memref<1x!tpu.dma_semaphore, #tpu.memory_space<semaphore_mem>> -> memref<!tpu.dma_semaphore, #tpu.memory_space<semaphore_mem>>
    tpu.wait_dma2 semaphore(%71 : memref<!tpu.dma_semaphore, #tpu.memory_space<semaphore_mem>>) src(%68 : memref<1x32xf32, #tpu.memory_space<any>>) dst(%69 : memref<1x32xf32, #tpu.memory_space<vmem>>)
    %c0_64 = arith.constant 0 : index
    %c0_65 = arith.constant 0 : index
    %72 = vector.load %arg3[%c0_64, %c0_65] : memref<2x32xf32, #tpu.memory_space<vmem>>, vector<1x32xf32>
    %c1_66 = arith.constant 1 : index
    %c0_67 = arith.constant 0 : index
    %73 = vector.load %arg3[%c1_66, %c0_67] : memref<2x32xf32, #tpu.memory_space<vmem>>, vector<1x32xf32>
    %c0_68 = arith.constant 0 : index
    %c0_69 = arith.constant 0 : index
    %74 = vector.load %arg1[%c0_68, %c0_69] : memref<8x16xi32, #tpu.memory_space<vmem>>, vector<8x1xi32>
    %75 = arith.sitofp %74 : vector<8x1xi32> to vector<8x1xf32>
    %c0_70 = arith.constant 0 : index
    %c0_71 = arith.constant 0 : index
    %76 = vector.load %arg9[%c0_70, %c0_71] : memref<8x32xf32, #tpu.memory_space<vmem>>, vector<8x32xf32>
    %77 = arith.subf %73, %72 : vector<1x32xf32>
    %78 = vector.broadcast %75 : vector<8x1xf32> to vector<8x32xf32>
    %79 = vector.broadcast %77 : vector<1x32xf32> to vector<8x32xf32>
    %80 = arith.mulf %78, %79 : vector<8x32xf32>
    %81 = vector.broadcast %72 : vector<1x32xf32> to vector<8x32xf32>
    %82 = arith.addf %81, %80 : vector<8x32xf32>
    %83 = arith.addf %76, %82 : vector<8x32xf32>
    %84 = arith.truncf %83 : vector<8x32xf32> to vector<8x32xbf16>
    %c0_72 = arith.constant 0 : index
    %c0_73 = arith.constant 0 : index
    %85 = vector.load %arg4[%c0_72, %c0_73] : memref<32x32xbf16, #tpu.memory_space<vmem>>, vector<32x32xbf16>
    %cst = arith.constant dense<0.000000e+00> : vector<8x32xf32>
    %86 = tpu.matmul %84, %85, %cst {dimension_numbers = #tpu.dot_dimension_numbers<[1], [0], [0], [1], [0, 0, 1, 1], [], []>} : vector<8x32xbf16>, vector<32x32xbf16>, vector<8x32xf32> -> vector<8x32xf32>
    %c0_74 = arith.constant 0 : index
    %c0_75 = arith.constant 0 : index
    %87 = vector.load %arg5[%c0_74, %c0_75] : memref<1x32xf32, #tpu.memory_space<vmem>>, vector<1x32xf32>
    %88 = vector.broadcast %87 : vector<1x32xf32> to vector<8x32xf32>
    %89 = arith.addf %86, %88 : vector<8x32xf32>
    %90 = math.tanh %89 : vector<8x32xf32>
    %91 = arith.truncf %90 : vector<8x32xf32> to vector<8x32xbf16>
    %c0_76 = arith.constant 0 : index
    %c0_77 = arith.constant 0 : index
    %92 = vector.load %arg6[%c0_76, %c0_77] : memref<32x128xbf16, #tpu.memory_space<vmem>>, vector<32x128xbf16>
    %cst_78 = arith.constant dense<0.000000e+00> : vector<8x128xf32>
    %93 = tpu.matmul %91, %92, %cst_78 {dimension_numbers = #tpu.dot_dimension_numbers<[1], [0], [0], [1], [0, 0, 1, 1], [], []>} : vector<8x32xbf16>, vector<32x128xbf16>, vector<8x128xf32> -> vector<8x128xf32>
    %c0_79 = arith.constant 0 : index
    %c0_80 = arith.constant 0 : index
    %94 = vector.load %arg7[%c0_79, %c0_80] : memref<1x128xf32, #tpu.memory_space<vmem>>, vector<1x128xf32>
    %95 = vector.broadcast %94 : vector<1x128xf32> to vector<8x128xf32>
    %96 = arith.addf %93, %95 : vector<8x128xf32>
    %c0_81 = arith.constant 0 : index
    %c0_82 = arith.constant 0 : index
    %97 = vector.load %arg8[%c0_81, %c0_82] : memref<8x128xf32, #tpu.memory_space<vmem>>, vector<8x128xf32>
    tpu.vector_store %arg8[%c0_81, %c0_82], %96 {strides = array<i32>} : memref<8x128xf32, #tpu.memory_space<vmem>>, vector<8x128xf32>,
    return
  }
}

</mosaic_0001>

<llo_original>
// kernel: tpu_custom_call.1
$region0: #{tpu_custom_call.1}
  #allocation0 [shape = 'u32[]', space=smem, size = 0x4, offset = 0x4, fixed_abs, tag = 'smem constant byte address 0x4 - core index']
  #allocation1 [shape = 'u32[144,128]{1,0:T(1,128)}', space=vmem, size = 0x12000, scoped, tag = 'internal scratch']
  #allocation2 [shape = 'f32[8,32]{1,0:T(8,128)}', space=vmem, size = 0x1000, scoped, tag = 'scratch operand']
  #allocation3 [shape = 's32[8]{0}', space=sflag, size = 0x20, scoped, tag = 'scratch operand']
  #allocation8 [shape = 's32[]', space=sflag, size = 0x4, offset = 0, fixed_abs, tag = 'sflag constant byte address 0x0 - dummy sync flag']
  #allocation9 [shape = 's32[]', space=sflag, size = 0x4, offset = 0, fixed_abs, tag = 'sflag constant byte address 0x0 - dummy sync flag']
  #allocation10 [shape = 's32[]', space=sflag, size = 0x4, offset = 0, fixed_abs, tag = 'sflag constant byte address 0x0 - dummy sync flag']
  #allocation11 [shape = 's32[]', space=sflag, size = 0x4, offset = 0, fixed_abs, tag = 'sflag constant byte address 0x0 - dummy sync flag']
  #allocation12 [shape = 's32[]', space=sflag, size = 0x4, offset = 0, fixed_abs, tag = 'sflag constant byte address 0x0 - dummy sync flag']
  #allocation13 [shape = 's32[]', space=sflag, size = 0x4, offset = 0, fixed_abs, tag = 'sflag constant byte address 0x0 - dummy sync flag']
  #allocation14 [shape = 's32[]', space=sflag, size = 0x4, offset = 0, fixed_abs, tag = 'sflag constant byte address 0x0 - dummy sync flag']
  #allocation15 [shape = 's32[]', space=sflag, size = 0x4, offset = 0, fixed_abs, tag = 'sflag constant byte address 0x0 - dummy sync flag']
  %s0 = inlined_call_operand.vmem [shape: s32[8,16], index: 0, kind: input, shape index: {}]
  %s1 = inlined_call_operand.vmem [shape: s32[8,16], index: 1, kind: input, shape index: {}]
  %s2 = inlined_call_operand.vmem [shape: f32[64,32], index: 2, kind: input, shape index: {}]
  %s3 = inlined_call_operand.vmem [shape: f32[2,32], index: 3, kind: input, shape index: {}]
  %s4 = inlined_call_operand.vmem [shape: bf16[32,32], index: 4, kind: input, shape index: {}]
  %s5 = inlined_call_operand.vmem [shape: f32[1,32], index: 5, kind: input, shape index: {}]
  %s6 = inlined_call_operand.vmem [shape: bf16[32,128], index: 6, kind: input, shape index: {}]
  %s7 = inlined_call_operand.vmem [shape: f32[1,128], index: 7, kind: input, shape index: {}]
  %s8 = inlined_call_operand.hbm [shape: f32[8,128], index: 8, kind: output, shape index: {}]
  %s9 = sld [smem:[#allocation0]]
  $region282: #{tpu_custom_call.1} parent=0
    _
  %s11 = ssub.s32 1, %s9
  %s12 = scalar_select 0, %s11, %s9
  $region1: #{tpu_custom_call.1} parent=0
    #allocation4 [shape = 'u8[4096]{0}', space=smem, size = 0x1000, scoped, tag = 'input window, operand 0, single buffered']
    #allocation5 [shape = 's32[1]{0}', space=sflag, size = 0x4, scoped, tag = 'scoped memory for tpu_custom_call.1']
    #allocation6 [shape = 's32[1]{0}', space=sflag, size = 0x4, scoped, tag = 'scoped memory for tpu_custom_call.1']
    #allocation7 [shape = 'u8[4096]{0}', space=vmem, size = 0x1000, scoped, tag = 'output window, operand 0, single buffered']
    %13 = vsyncpa [#allocation6], 0
    %14 = vsyncpa [#allocation5], 0
    // Predicated region
    $region2: #{tpu_custom_call.1} parent=1 // pred_check
      _
    $region3: #{tpu_custom_call.1} parent=1 // pred_check_branch
      %16 = sbr.rel (0) target = $region5
    $region4: #{tpu_custom_call.1} parent=1 // pred_region
      %s18 = ssub.s32 128, 128
      %19 = vsyncadd [#allocation6], %s18
      %s21 = sshll.u32 %s0, 4
      %s22 = int_to_ptr.vmem [resolvable:$true] %s21
      %24 = dma.vmem_to_smem %s22, 128, [#allocation4], [#allocation6]
    $region5: #{tpu_custom_call.1} parent=1 // pred_fallthru
      _
    // Predicated region
    $region6: #{tpu_custom_call.1} parent=1 // pred_check
      _
    $region7: #{tpu_custom_call.1} parent=1 // pred_check_branch
      %26 = sbr.rel (0) target = $region9
    $region8: #{tpu_custom_call.1} parent=1 // pred_region
      _
    $region9: #{tpu_custom_call.1} parent=1 // pred_fallthru
      _
    // Predicated region
    $region10: #{tpu_custom_call.1} parent=1 // pred_check
      _
    $region11: #{tpu_custom_call.1} parent=1 // pred_check_branch
      %28 = sbr.rel (0) target = $region13
    $region12: #{tpu_custom_call.1} parent=1 // pred_region
      _
    $region13: #{tpu_custom_call.1} parent=1 // pred_fallthru
      _
    // Predicated region
    $region14: #{tpu_custom_call.1} parent=1 // pred_check
      _
    $region15: #{tpu_custom_call.1} parent=1 // pred_check_branch
      %30 = sbr.rel (0) target = $region17
    $region16: #{tpu_custom_call.1} parent=1 // pred_region
      _
    $region17: #{tpu_custom_call.1} parent=1 // pred_fallthru
      _
    // Predicated region
    $region18: #{tpu_custom_call.1} parent=1 // pred_check
      _
    $region19: #{tpu_custom_call.1} parent=1 // pred_check_branch
      %32 = sbr.rel (0) target = $region21
    $region20: #{tpu_custom_call.1} parent=1 // pred_region
      _
    $region21: #{tpu_custom_call.1} parent=1 // pred_fallthru
      _
    // Predicated region
    $region22: #{tpu_custom_call.1} parent=1 // pred_check
      _
    $region23: #{tpu_custom_call.1} parent=1 // pred_check_branch
      %34 = sbr.rel (0) target = $region25
    $region24: #{tpu_custom_call.1} parent=1 // pred_region
      _
    $region25: #{tpu_custom_call.1} parent=1 // pred_fallthru
      _
    // Predicated region
    $region26: #{tpu_custom_call.1} parent=1 // pred_check
      _
    $region27: #{tpu_custom_call.1} parent=1 // pred_check_branch
      %36 = sbr.rel (0) target = $region29
    $region28: #{tpu_custom_call.1} parent=1 // pred_region
      _
    $region29: #{tpu_custom_call.1} parent=1 // pred_fallthru
      _
    // Predicated region
    $region30: #{tpu_custom_call.1} parent=1 // pred_check
      _
    $region31: #{tpu_custom_call.1} parent=1 // pred_check_branch
      %38 = sbr.rel (0) target = $region33
    $region32: #{tpu_custom_call.1} parent=1 // pred_region
      %39 = dma.done [#allocation6], 128
    $region33: #{tpu_custom_call.1} parent=1 // pred_fallthru
      _
    %40 = sfence
    %s42 = sld [smem:[#allocation4]]
    %s43 = scalar_lea.vmem %s2, %s42
    %p45 = scmp.lt.u32.totalorder 1, 8
    %p46 = pneg %p45
    // Predicated region
    $region34: #{tpu_custom_call.1} parent=1 // pred_check
      _
    $region35: #{tpu_custom_call.1} parent=1 // pred_check_branch
      %48 = sbr.rel (%p45) target = $region37
    $region36: #{tpu_custom_call.1} parent=1 // pred_region
      %s63 = sand.u32 1, 7
      %p64 = scmp.eq.s32.totalorder %s63, 0
      %p65 = pneg %p64
      // Predicated region
      $region49: #{tpu_custom_call.1} parent=36 // pred_check
        _
      $region50: #{tpu_custom_call.1} parent=36 // pred_check_branch
        %67 = sbr.rel (%p64) target = $region52
      $region51: #{tpu_custom_call.1} parent=36 // pred_region
        %s68 = sand.u32 1, 7
        %s69 = ssub.s32 1, %s68
        %s70 = scalar_lea.vmem %s43, %s69
        %s71 = ssub.s32 1, %s68
        %s72 = scalar_lea.vmem [#allocation2], %s71
        %s73 = sshllo.u32 0, %s68
        loop: start=0, step=1, limit=1
        $region53: #{tpu_custom_call.1} parent=51 // loop_pre_header
          _
        $region54: #{tpu_custom_call.1} parent=51 // loop_header
          %s75 = sphi 0, %s79
          %p76 = scmp.ge.s32.totalorder %s75, 1
          %s80 = sphi %s70, %s70
          %s81 = sphi %s72, %s72
        $region55: #{tpu_custom_call.1} parent=51 // loop_header_branch
          %78 = sbr.rel (%p76) target = $region59
        $region56: #{tpu_custom_call.1} parent=51 // loop_body
          %v82 = vld [vmem:[%s80] sm:%s73]
          %83 = vst [vmem:[%s81] sm:%s73] %v82
        $region57: #{tpu_custom_call.1} parent=51 // loop_footer
          %s79 = sadd.s32 1, %s75
        $region58: #{tpu_custom_call.1} parent=51 // loop_footer_branch
          %74 = sbr.rel target = $region54
        $region59: #{tpu_custom_call.1} parent=51 // loop_exit
          _
      $region52: #{tpu_custom_call.1} parent=36 // pred_fallthru
        _
    $region37: #{tpu_custom_call.1} parent=1 // pred_fallthru
      _
    // Predicated region
    $region38: #{tpu_custom_call.1} parent=1 // pred_check
      %p49 = pneg %p45
    $region39: #{tpu_custom_call.1} parent=1 // pred_check_branch
      %51 = sbr.rel (%p49) target = $region41
    $region40: #{tpu_custom_call.1} parent=1 // pred_region
      %s52 = sshllo.u32 0, 1
      loop: start=0, step=1, limit=1
      $region42: #{tpu_custom_call.1} parent=40 // loop_pre_header
        _
      $region43: #{tpu_custom_call.1} parent=40 // loop_header
        %s54 = sphi 0, %s58
        %p55 = scmp.ge.s32.totalorder %s54, 1
        %s59 = sphi %s43, %s43
        %s60 = sphi [#allocation2], [#allocation2]
      $region44: #{tpu_custom_call.1} parent=40 // loop_header_branch
        %57 = sbr.rel (%p55) target = $region48
      $region45: #{tpu_custom_call.1} parent=40 // loop_body
        %v61 = vld [vmem:[%s59] sm:%s52]
        %62 = vst [vmem:[%s60] sm:%s52] %v61
      $region46: #{tpu_custom_call.1} parent=40 // loop_footer
        %s58 = sadd.s32 1, %s54
      $region47: #{tpu_custom_call.1} parent=40 // loop_footer_branch
        %53 = sbr.rel target = $region43
      $region48: #{tpu_custom_call.1} parent=40 // loop_exit
        _
    $region41: #{tpu_custom_call.1} parent=1 // pred_fallthru
      _
    // Predicated region
    $region60: #{tpu_custom_call.1} parent=1 // pred_check
      _
    $region61: #{tpu_custom_call.1} parent=1 // pred_check_branch
      %86 = sbr.rel (0) target = $region63
    $region62: #{tpu_custom_call.1} parent=1 // pred_region
      %87 = vsyncadd [#allocation3], 16
    $region63: #{tpu_custom_call.1} parent=1 // pred_fallthru
      _
    %s88 = sld [smem:[#allocation4 + $0x80]]
    %s89 = scalar_lea.vmem %s2, %s88
    %s90 = scalar_lea.vmem [#allocation2], 1
    %s91 = scalar_lea.sflag [#allocation3], 1
    %p93 = scmp.lt.u32.totalorder 1, 8
    %p94 = pneg %p93
    // Predicated region
    $region64: #{tpu_custom_call.1} parent=1 // pred_check
      _
    $region65: #{tpu_custom_call.1} parent=1 // pred_check_branch
      %96 = sbr.rel (%p93) target = $region67
    $region66: #{tpu_custom_call.1} parent=1 // pred_region
      %s111 = sand.u32 1, 7
      %p112 = scmp.eq.s32.totalorder %s111, 0
      %p113 = pneg %p112
      // Predicated region
      $region79: #{tpu_custom_call.1} parent=66 // pred_check
        _
      $region80: #{tpu_custom_call.1} parent=66 // pred_check_branch
        %115 = sbr.rel (%p112) target = $region82
      $region81: #{tpu_custom_call.1} parent=66 // pred_region
        %s116 = sand.u32 1, 7
        %s117 = ssub.s32 1, %s116
        %s118 = scalar_lea.vmem %s89, %s117
        %s119 = ssub.s32 1, %s116
        %s120 = scalar_lea.vmem %s90, %s119 [#allocation2]
        %s121 = sshllo.u32 0, %s116
        loop: start=0, step=1, limit=1
        $region83: #{tpu_custom_call.1} parent=81 // loop_pre_header
          _
        $region84: #{tpu_custom_call.1} parent=81 // loop_header
          %s123 = sphi 0, %s127
          %p124 = scmp.ge.s32.totalorder %s123, 1
          %s128 = sphi %s118, %s118
          %s129 = sphi %s120, %s120
        $region85: #{tpu_custom_call.1} parent=81 // loop_header_branch
          %126 = sbr.rel (%p124) target = $region89
        $region86: #{tpu_custom_call.1} parent=81 // loop_body
          %v130 = vld [vmem:[%s128] sm:%s121]
          %131 = vst [vmem:[%s129] sm:%s121] %v130
        $region87: #{tpu_custom_call.1} parent=81 // loop_footer
          %s127 = sadd.s32 1, %s123
        $region88: #{tpu_custom_call.1} parent=81 // loop_footer_branch
          %122 = sbr.rel target = $region84
        $region89: #{tpu_custom_call.1} parent=81 // loop_exit
          _
      $region82: #{tpu_custom_call.1} parent=66 // pred_fallthru
        _
    $region67: #{tpu_custom_call.1} parent=1 // pred_fallthru
      _
    // Predicated region
    $region68: #{tpu_custom_call.1} parent=1 // pred_check
      %p97 = pneg %p93
    $region69: #{tpu_custom_call.1} parent=1 // pred_check_branch
      %99 = sbr.rel (%p97) target = $region71
    $region70: #{tpu_custom_call.1} parent=1 // pred_region
      %s100 = sshllo.u32 0, 1
      loop: start=0, step=1, limit=1
      $region72: #{tpu_custom_call.1} parent=70 // loop_pre_header
        _
      $region73: #{tpu_custom_call.1} parent=70 // loop_header
        %s102 = sphi 0, %s106
        %p103 = scmp.ge.s32.totalorder %s102, 1
        %s107 = sphi %s89, %s89
        %s108 = sphi %s90, %s90
      $region74: #{tpu_custom_call.1} parent=70 // loop_header_branch
        %105 = sbr.rel (%p103) target = $region78
      $region75: #{tpu_custom_call.1} parent=70 // loop_body
        %v109 = vld [vmem:[%s107] sm:%s100]
        %110 = vst [vmem:[%s108] sm:%s100] %v109
      $region76: #{tpu_custom_call.1} parent=70 // loop_footer
        %s106 = sadd.s32 1, %s102
      $region77: #{tpu_custom_call.1} parent=70 // loop_footer_branch
        %101 = sbr.rel target = $region73
      $region78: #{tpu_custom_call.1} parent=70 // loop_exit
        _
    $region71: #{tpu_custom_call.1} parent=1 // pred_fallthru
      _
    // Predicated region
    $region90: #{tpu_custom_call.1} parent=1 // pred_check
      _
    $region91: #{tpu_custom_call.1} parent=1 // pred_check_branch
      %134 = sbr.rel (0) target = $region93
    $region92: #{tpu_custom_call.1} parent=1 // pred_region
      %135 = vsyncadd %s91, 16
    $region93: #{tpu_custom_call.1} parent=1 // pred_fallthru
      _
    %s136 = sld [smem:[#allocation4 + $0x100]]
    %s137 = scalar_lea.vmem %s2, %s136
    %s138 = scalar_lea.vmem [#allocation2], 2
    %s139 = scalar_lea.sflag [#allocation3], 2
    %p141 = scmp.lt.u32.totalorder 1, 8
    %p142 = pneg %p141
    // Predicated region
    $region94: #{tpu_custom_call.1} parent=1 // pred_check
      _
    $region95: #{tpu_custom_call.1} parent=1 // pred_check_branch
      %144 = sbr.rel (%p141) target = $region97
    $region96: #{tpu_custom_call.1} parent=1 // pred_region
      %s159 = sand.u32 1, 7
      %p160 = scmp.eq.s32.totalorder %s159, 0
      %p161 = pneg %p160
      // Predicated region
      $region109: #{tpu_custom_call.1} parent=96 // pred_check
        _
      $region110: #{tpu_custom_call.1} parent=96 // pred_check_branch
        %163 = sbr.rel (%p160) target = $region112
      $region111: #{tpu_custom_call.1} parent=96 // pred_region
        %s164 = sand.u32 1, 7
        %s165 = ssub.s32 1, %s164
        %s166 = scalar_lea.vmem %s137, %s165
        %s167 = ssub.s32 1, %s164
        %s168 = scalar_lea.vmem %s138, %s167 [#allocation2]
        %s169 = sshllo.u32 0, %s164
        loop: start=0, step=1, limit=1
        $region113: #{tpu_custom_call.1} parent=111 // loop_pre_header
          _
        $region114: #{tpu_custom_call.1} parent=111 // loop_header
          %s171 = sphi 0, %s175
          %p172 = scmp.ge.s32.totalorder %s171, 1
          %s176 = sphi %s166, %s166
          %s177 = sphi %s168, %s168
        $region115: #{tpu_custom_call.1} parent=111 // loop_header_branch
          %174 = sbr.rel (%p172) target = $region119
        $region116: #{tpu_custom_call.1} parent=111 // loop_body
          %v178 = vld [vmem:[%s176] sm:%s169]
          %179 = vst [vmem:[%s177] sm:%s169] %v178
        $region117: #{tpu_custom_call.1} parent=111 // loop_footer
          %s175 = sadd.s32 1, %s171
        $region118: #{tpu_custom_call.1} parent=111 // loop_footer_branch
          %170 = sbr.rel target = $region114
        $region119: #{tpu_custom_call.1} parent=111 // loop_exit
          _
      $region112: #{tpu_custom_call.1} parent=96 // pred_fallthru
        _
    $region97: #{tpu_custom_call.1} parent=1 // pred_fallthru
      _
    // Predicated region
    $region98: #{tpu_custom_call.1} parent=1 // pred_check
      %p145 = pneg %p141
    $region99: #{tpu_custom_call.1} parent=1 // pred_check_branch
      %147 = sbr.rel (%p145) target = $region101
    $region100: #{tpu_custom_call.1} parent=1 // pred_region
      %s148 = sshllo.u32 0, 1
      loop: start=0, step=1, limit=1
      $region102: #{tpu_custom_call.1} parent=100 // loop_pre_header
        _
      $region103: #{tpu_custom_call.1} parent=100 // loop_header
        %s150 = sphi 0, %s154
        %p151 = scmp.ge.s32.totalorder %s150, 1
        %s155 = sphi %s137, %s137
        %s156 = sphi %s138, %s138
      $region104: #{tpu_custom_call.1} parent=100 // loop_header_branch
        %153 = sbr.rel (%p151) target = $region108
      $region105: #{tpu_custom_call.1} parent=100 // loop_body
        %v157 = vld [vmem:[%s155] sm:%s148]
        %158 = vst [vmem:[%s156] sm:%s148] %v157
      $region106: #{tpu_custom_call.1} parent=100 // loop_footer
        %s154 = sadd.s32 1, %s150
      $region107: #{tpu_custom_call.1} parent=100 // loop_footer_branch
        %149 = sbr.rel target = $region103
      $region108: #{tpu_custom_call.1} parent=100 // loop_exit
        _
    $region101: #{tpu_custom_call.1} parent=1 // pred_fallthru
      _
    // Predicated region
    $region120: #{tpu_custom_call.1} parent=1 // pred_check
      _
    $region121: #{tpu_custom_call.1} parent=1 // pred_check_branch
      %182 = sbr.rel (0) target = $region123
    $region122: #{tpu_custom_call.1} parent=1 // pred_region
      %183 = vsyncadd %s139, 16
    $region123: #{tpu_custom_call.1} parent=1 // pred_fallthru
      _
    %s184 = sld [smem:[#allocation4 + $0x180]]
    %s185 = scalar_lea.vmem %s2, %s184
    %s186 = scalar_lea.vmem [#allocation2], 3
    %s187 = scalar_lea.sflag [#allocation3], 3
    %p189 = scmp.lt.u32.totalorder 1, 8
    %p190 = pneg %p189
    // Predicated region
    $region124: #{tpu_custom_call.1} parent=1 // pred_check
      _
    $region125: #{tpu_custom_call.1} parent=1 // pred_check_branch
      %192 = sbr.rel (%p189) target = $region127
    $region126: #{tpu_custom_call.1} parent=1 // pred_region
      %s207 = sand.u32 1, 7
      %p208 = scmp.eq.s32.totalorder %s207, 0
      %p209 = pneg %p208
      // Predicated region
      $region139: #{tpu_custom_call.1} parent=126 // pred_check
        _
      $region140: #{tpu_custom_call.1} parent=126 // pred_check_branch
        %211 = sbr.rel (%p208) target = $region142
      $region141: #{tpu_custom_call.1} parent=126 // pred_region
        %s212 = sand.u32 1, 7
        %s213 = ssub.s32 1, %s212
        %s214 = scalar_lea.vmem %s185, %s213
        %s215 = ssub.s32 1, %s212
        %s216 = scalar_lea.vmem %s186, %s215 [#allocation2]
        %s217 = sshllo.u32 0, %s212
        loop: start=0, step=1, limit=1
        $region143: #{tpu_custom_call.1} parent=141 // loop_pre_header
          _
        $region144: #{tpu_custom_call.1} parent=141 // loop_header
          %s219 = sphi 0, %s223
          %p220 = scmp.ge.s32.totalorder %s219, 1
          %s224 = sphi %s214, %s214
          %s225 = sphi %s216, %s216
        $region145: #{tpu_custom_call.1} parent=141 // loop_header_branch
          %222 = sbr.rel (%p220) target = $region149
        $region146: #{tpu_custom_call.1} parent=141 // loop_body
          %v226 = vld [vmem:[%s224] sm:%s217]
          %227 = vst [vmem:[%s225] sm:%s217] %v226
        $region147: #{tpu_custom_call.1} parent=141 // loop_footer
          %s223 = sadd.s32 1, %s219
        $region148: #{tpu_custom_call.1} parent=141 // loop_footer_branch
          %218 = sbr.rel target = $region144
        $region149: #{tpu_custom_call.1} parent=141 // loop_exit
          _
      $region142: #{tpu_custom_call.1} parent=126 // pred_fallthru
        _
    $region127: #{tpu_custom_call.1} parent=1 // pred_fallthru
      _
    // Predicated region
    $region128: #{tpu_custom_call.1} parent=1 // pred_check
      %p193 = pneg %p189
    $region129: #{tpu_custom_call.1} parent=1 // pred_check_branch
      %195 = sbr.rel (%p193) target = $region131
    $region130: #{tpu_custom_call.1} parent=1 // pred_region
      %s196 = sshllo.u32 0, 1
      loop: start=0, step=1, limit=1
      $region132: #{tpu_custom_call.1} parent=130 // loop_pre_header
        _
      $region133: #{tpu_custom_call.1} parent=130 // loop_header
        %s198 = sphi 0, %s202
        %p199 = scmp.ge.s32.totalorder %s198, 1
        %s203 = sphi %s185, %s185
        %s204 = sphi %s186, %s186
      $region134: #{tpu_custom_call.1} parent=130 // loop_header_branch
        %201 = sbr.rel (%p199) target = $region138
      $region135: #{tpu_custom_call.1} parent=130 // loop_body
        %v205 = vld [vmem:[%s203] sm:%s196]
        %206 = vst [vmem:[%s204] sm:%s196] %v205
      $region136: #{tpu_custom_call.1} parent=130 // loop_footer
        %s202 = sadd.s32 1, %s198
      $region137: #{tpu_custom_call.1} parent=130 // loop_footer_branch
        %197 = sbr.rel target = $region133
      $region138: #{tpu_custom_call.1} parent=130 // loop_exit
        _
    $region131: #{tpu_custom_call.1} parent=1 // pred_fallthru
      _
    // Predicated region
    $region150: #{tpu_custom_call.1} parent=1 // pred_check
      _
    $region151: #{tpu_custom_call.1} parent=1 // pred_check_branch
      %230 = sbr.rel (0) target = $region153
    $region152: #{tpu_custom_call.1} parent=1 // pred_region
      %231 = vsyncadd %s187, 16
    $region153: #{tpu_custom_call.1} parent=1 // pred_fallthru
      _
    %s232 = sld [smem:[#allocation4 + $0x200]]
    %s233 = scalar_lea.vmem %s2, %s232
    %s234 = scalar_lea.vmem [#allocation2], 4
    %s235 = scalar_lea.sflag [#allocation3], 4
    %p237 = scmp.lt.u32.totalorder 1, 8
    %p238 = pneg %p237
    // Predicated region
    $region154: #{tpu_custom_call.1} parent=1 // pred_check
      _
    $region155: #{tpu_custom_call.1} parent=1 // pred_check_branch
      %240 = sbr.rel (%p237) target = $region157
    $region156: #{tpu_custom_call.1} parent=1 // pred_region
      %s255 = sand.u32 1, 7
      %p256 = scmp.eq.s32.totalorder %s255, 0
      %p257 = pneg %p256
      // Predicated region
      $region169: #{tpu_custom_call.1} parent=156 // pred_check
        _
      $region170: #{tpu_custom_call.1} parent=156 // pred_check_branch
        %259 = sbr.rel (%p256) target = $region172
      $region171: #{tpu_custom_call.1} parent=156 // pred_region
        %s260 = sand.u32 1, 7
        %s261 = ssub.s32 1, %s260
        %s262 = scalar_lea.vmem %s233, %s261
        %s263 = ssub.s32 1, %s260
        %s264 = scalar_lea.vmem %s234, %s263 [#allocation2]
        %s265 = sshllo.u32 0, %s260
        loop: start=0, step=1, limit=1
        $region173: #{tpu_custom_call.1} parent=171 // loop_pre_header
          _
        $region174: #{tpu_custom_call.1} parent=171 // loop_header
          %s267 = sphi 0, %s271
          %p268 = scmp.ge.s32.totalorder %s267, 1
          %s272 = sphi %s262, %s262
          %s273 = sphi %s264, %s264
        $region175: #{tpu_custom_call.1} parent=171 // loop_header_branch
          %270 = sbr.rel (%p268) target = $region179
        $region176: #{tpu_custom_call.1} parent=171 // loop_body
          %v274 = vld [vmem:[%s272] sm:%s265]
          %275 = vst [vmem:[%s273] sm:%s265] %v274
        $region177: #{tpu_custom_call.1} parent=171 // loop_footer
          %s271 = sadd.s32 1, %s267
        $region178: #{tpu_custom_call.1} parent=171 // loop_footer_branch
          %266 = sbr.rel target = $region174
        $region179: #{tpu_custom_call.1} parent=171 // loop_exit
          _
      $region172: #{tpu_custom_call.1} parent=156 // pred_fallthru
        _
    $region157: #{tpu_custom_call.1} parent=1 // pred_fallthru
      _
    // Predicated region
    $region158: #{tpu_custom_call.1} parent=1 // pred_check
      %p241 = pneg %p237
    $region159: #{tpu_custom_call.1} parent=1 // pred_check_branch
      %243 = sbr.rel (%p241) target = $region161
    $region160: #{tpu_custom_call.1} parent=1 // pred_region
      %s244 = sshllo.u32 0, 1
      loop: start=0, step=1, limit=1
      $region162: #{tpu_custom_call.1} parent=160 // loop_pre_header
        _
      $region163: #{tpu_custom_call.1} parent=160 // loop_header
        %s246 = sphi 0, %s250
        %p247 = scmp.ge.s32.totalorder %s246, 1
        %s251 = sphi %s233, %s233
        %s252 = sphi %s234, %s234
      $region164: #{tpu_custom_call.1} parent=160 // loop_header_branch
        %249 = sbr.rel (%p247) target = $region168
      $region165: #{tpu_custom_call.1} parent=160 // loop_body
        %v253 = vld [vmem:[%s251] sm:%s244]
        %254 = vst [vmem:[%s252] sm:%s244] %v253
      $region166: #{tpu_custom_call.1} parent=160 // loop_footer
        %s250 = sadd.s32 1, %s246
      $region167: #{tpu_custom_call.1} parent=160 // loop_footer_branch
        %245 = sbr.rel target = $region163
      $region168: #{tpu_custom_call.1} parent=160 // loop_exit
        _
    $region161: #{tpu_custom_call.1} parent=1 // pred_fallthru
      _
    // Predicated region
    $region180: #{tpu_custom_call.1} parent=1 // pred_check
      _
    $region181: #{tpu_custom_call.1} parent=1 // pred_check_branch
      %278 = sbr.rel (0) target = $region183
    $region182: #{tpu_custom_call.1} parent=1 // pred_region
      %279 = vsyncadd %s235, 16
    $region183: #{tpu_custom_call.1} parent=1 // pred_fallthru
      _
    %s280 = sld [smem:[#allocation4 + $0x280]]
    %s281 = scalar_lea.vmem %s2, %s280
    %s282 = scalar_lea.vmem [#allocation2], 5
    %s283 = scalar_lea.sflag [#allocation3], 5
    %p285 = scmp.lt.u32.totalorder 1, 8
    %p286 = pneg %p285
    // Predicated region
    $region184: #{tpu_custom_call.1} parent=1 // pred_check
      _
    $region185: #{tpu_custom_call.1} parent=1 // pred_check_branch
      %288 = sbr.rel (%p285) target = $region187
    $region186: #{tpu_custom_call.1} parent=1 // pred_region
      %s303 = sand.u32 1, 7
      %p304 = scmp.eq.s32.totalorder %s303, 0
      %p305 = pneg %p304
      // Predicated region
      $region199: #{tpu_custom_call.1} parent=186 // pred_check
        _
      $region200: #{tpu_custom_call.1} parent=186 // pred_check_branch
        %307 = sbr.rel (%p304) target = $region202
      $region201: #{tpu_custom_call.1} parent=186 // pred_region
        %s308 = sand.u32 1, 7
        %s309 = ssub.s32 1, %s308
        %s310 = scalar_lea.vmem %s281, %s309
        %s311 = ssub.s32 1, %s308
        %s312 = scalar_lea.vmem %s282, %s311 [#allocation2]
        %s313 = sshllo.u32 0, %s308
        loop: start=0, step=1, limit=1
        $region203: #{tpu_custom_call.1} parent=201 // loop_pre_header
          _
        $region204: #{tpu_custom_call.1} parent=201 // loop_header
          %s315 = sphi 0, %s319
          %p316 = scmp.ge.s32.totalorder %s315, 1
          %s320 = sphi %s310, %s310
          %s321 = sphi %s312, %s312
        $region205: #{tpu_custom_call.1} parent=201 // loop_header_branch
          %318 = sbr.rel (%p316) target = $region209
        $region206: #{tpu_custom_call.1} parent=201 // loop_body
          %v322 = vld [vmem:[%s320] sm:%s313]
          %323 = vst [vmem:[%s321] sm:%s313] %v322
        $region207: #{tpu_custom_call.1} parent=201 // loop_footer
          %s319 = sadd.s32 1, %s315
        $region208: #{tpu_custom_call.1} parent=201 // loop_footer_branch
          %314 = sbr.rel target = $region204
        $region209: #{tpu_custom_call.1} parent=201 // loop_exit
          _
      $region202: #{tpu_custom_call.1} parent=186 // pred_fallthru
        _
    $region187: #{tpu_custom_call.1} parent=1 // pred_fallthru
      _
    // Predicated region
    $region188: #{tpu_custom_call.1} parent=1 // pred_check
      %p289 = pneg %p285
    $region189: #{tpu_custom_call.1} parent=1 // pred_check_branch
      %291 = sbr.rel (%p289) target = $region191
    $region190: #{tpu_custom_call.1} parent=1 // pred_region
      %s292 = sshllo.u32 0, 1
      loop: start=0, step=1, limit=1
      $region192: #{tpu_custom_call.1} parent=190 // loop_pre_header
        _
      $region193: #{tpu_custom_call.1} parent=190 // loop_header
        %s294 = sphi 0, %s298
        %p295 = scmp.ge.s32.totalorder %s294, 1
        %s299 = sphi %s281, %s281
        %s300 = sphi %s282, %s282
      $region194: #{tpu_custom_call.1} parent=190 // loop_header_branch
        %297 = sbr.rel (%p295) target = $region198
      $region195: #{tpu_custom_call.1} parent=190 // loop_body
        %v301 = vld [vmem:[%s299] sm:%s292]
        %302 = vst [vmem:[%s300] sm:%s292] %v301
      $region196: #{tpu_custom_call.1} parent=190 // loop_footer
        %s298 = sadd.s32 1, %s294
      $region197: #{tpu_custom_call.1} parent=190 // loop_footer_branch
        %293 = sbr.rel target = $region193
      $region198: #{tpu_custom_call.1} parent=190 // loop_exit
        _
    $region191: #{tpu_custom_call.1} parent=1 // pred_fallthru
      _
    // Predicated region
    $region210: #{tpu_custom_call.1} parent=1 // pred_check
      _
    $region211: #{tpu_custom_call.1} parent=1 // pred_check_branch
      %326 = sbr.rel (0) target = $region213
    $region212: #{tpu_custom_call.1} parent=1 // pred_region
      %327 = vsyncadd %s283, 16
    $region213: #{tpu_custom_call.1} parent=1 // pred_fallthru
      _
    %s328 = sld [smem:[#allocation4 + $0x300]]
    %s329 = scalar_lea.vmem %s2, %s328
    %s330 = scalar_lea.vmem [#allocation2], 6
    %s331 = scalar_lea.sflag [#allocation3], 6
    %p333 = scmp.lt.u32.totalorder 1, 8
    %p334 = pneg %p333
    // Predicated region
    $region214: #{tpu_custom_call.1} parent=1 // pred_check
      _
    $region215: #{tpu_custom_call.1} parent=1 // pred_check_branch
      %336 = sbr.rel (%p333) target = $region217
    $region216: #{tpu_custom_call.1} parent=1 // pred_region
      %s351 = sand.u32 1, 7
      %p352 = scmp.eq.s32.totalorder %s351, 0
      %p353 = pneg %p352
      // Predicated region
      $region229: #{tpu_custom_call.1} parent=216 // pred_check
        _
      $region230: #{tpu_custom_call.1} parent=216 // pred_check_branch
        %355 = sbr.rel (%p352) target = $region232
      $region231: #{tpu_custom_call.1} parent=216 // pred_region
        %s356 = sand.u32 1, 7
        %s357 = ssub.s32 1, %s356
        %s358 = scalar_lea.vmem %s329, %s357
        %s359 = ssub.s32 1, %s356
        %s360 = scalar_lea.vmem %s330, %s359 [#allocation2]
        %s361 = sshllo.u32 0, %s356
        loop: start=0, step=1, limit=1
        $region233: #{tpu_custom_call.1} parent=231 // loop_pre_header
          _
        $region234: #{tpu_custom_call.1} parent=231 // loop_header
          %s363 = sphi 0, %s367
          %p364 = scmp.ge.s32.totalorder %s363, 1
          %s368 = sphi %s358, %s358
          %s369 = sphi %s360, %s360
        $region235: #{tpu_custom_call.1} parent=231 // loop_header_branch
          %366 = sbr.rel (%p364) target = $region239
        $region236: #{tpu_custom_call.1} parent=231 // loop_body
          %v370 = vld [vmem:[%s368] sm:%s361]
          %371 = vst [vmem:[%s369] sm:%s361] %v370
        $region237: #{tpu_custom_call.1} parent=231 // loop_footer
          %s367 = sadd.s32 1, %s363
        $region238: #{tpu_custom_call.1} parent=231 // loop_footer_branch
          %362 = sbr.rel target = $region234
        $region239: #{tpu_custom_call.1} parent=231 // loop_exit
          _
      $region232: #{tpu_custom_call.1} parent=216 // pred_fallthru
        _
    $region217: #{tpu_custom_call.1} parent=1 // pred_fallthru
      _
    // Predicated region
    $region218: #{tpu_custom_call.1} parent=1 // pred_check
      %p337 = pneg %p333
    $region219: #{tpu_custom_call.1} parent=1 // pred_check_branch
      %339 = sbr.rel (%p337) target = $region221
    $region220: #{tpu_custom_call.1} parent=1 // pred_region
      %s340 = sshllo.u32 0, 1
      loop: start=0, step=1, limit=1
      $region222: #{tpu_custom_call.1} parent=220 // loop_pre_header
        _
      $region223: #{tpu_custom_call.1} parent=220 // loop_header
        %s342 = sphi 0, %s346
        %p343 = scmp.ge.s32.totalorder %s342, 1
        %s347 = sphi %s329, %s329
        %s348 = sphi %s330, %s330
      $region224: #{tpu_custom_call.1} parent=220 // loop_header_branch
        %345 = sbr.rel (%p343) target = $region228
      $region225: #{tpu_custom_call.1} parent=220 // loop_body
        %v349 = vld [vmem:[%s347] sm:%s340]
        %350 = vst [vmem:[%s348] sm:%s340] %v349
      $region226: #{tpu_custom_call.1} parent=220 // loop_footer
        %s346 = sadd.s32 1, %s342
      $region227: #{tpu_custom_call.1} parent=220 // loop_footer_branch
        %341 = sbr.rel target = $region223
      $region228: #{tpu_custom_call.1} parent=220 // loop_exit
        _
    $region221: #{tpu_custom_call.1} parent=1 // pred_fallthru
      _
    // Predicated region
    $region240: #{tpu_custom_call.1} parent=1 // pred_check
      _
    $region241: #{tpu_custom_call.1} parent=1 // pred_check_branch
      %374 = sbr.rel (0) target = $region243
    $region242: #{tpu_custom_call.1} parent=1 // pred_region
      %375 = vsyncadd %s331, 16
    $region243: #{tpu_custom_call.1} parent=1 // pred_fallthru
      _
    %s376 = sld [smem:[#allocation4 + $0x380]]
    %s377 = scalar_lea.vmem %s2, %s376
    %s378 = scalar_lea.vmem [#allocation2], 7
    %s379 = scalar_lea.sflag [#allocation3], 7
    %p381 = scmp.lt.u32.totalorder 1, 8
    %p382 = pneg %p381
    // Predicated region
    $region244: #{tpu_custom_call.1} parent=1 // pred_check
      _
    $region245: #{tpu_custom_call.1} parent=1 // pred_check_branch
      %384 = sbr.rel (%p381) target = $region247
    $region246: #{tpu_custom_call.1} parent=1 // pred_region
      %s399 = sand.u32 1, 7
      %p400 = scmp.eq.s32.totalorder %s399, 0
      %p401 = pneg %p400
      // Predicated region
      $region259: #{tpu_custom_call.1} parent=246 // pred_check
        _
      $region260: #{tpu_custom_call.1} parent=246 // pred_check_branch
        %403 = sbr.rel (%p400) target = $region262
      $region261: #{tpu_custom_call.1} parent=246 // pred_region
        %s404 = sand.u32 1, 7
        %s405 = ssub.s32 1, %s404
        %s406 = scalar_lea.vmem %s377, %s405
        %s407 = ssub.s32 1, %s404
        %s408 = scalar_lea.vmem %s378, %s407 [#allocation2]
        %s409 = sshllo.u32 0, %s404
        loop: start=0, step=1, limit=1
        $region263: #{tpu_custom_call.1} parent=261 // loop_pre_header
          _
        $region264: #{tpu_custom_call.1} parent=261 // loop_header
          %s411 = sphi 0, %s415
          %p412 = scmp.ge.s32.totalorder %s411, 1
          %s416 = sphi %s406, %s406
          %s417 = sphi %s408, %s408
        $region265: #{tpu_custom_call.1} parent=261 // loop_header_branch
          %414 = sbr.rel (%p412) target = $region269
        $region266: #{tpu_custom_call.1} parent=261 // loop_body
          %v418 = vld [vmem:[%s416] sm:%s409]
          %419 = vst [vmem:[%s417] sm:%s409] %v418
        $region267: #{tpu_custom_call.1} parent=261 // loop_footer
          %s415 = sadd.s32 1, %s411
        $region268: #{tpu_custom_call.1} parent=261 // loop_footer_branch
          %410 = sbr.rel target = $region264
        $region269: #{tpu_custom_call.1} parent=261 // loop_exit
          _
      $region262: #{tpu_custom_call.1} parent=246 // pred_fallthru
        _
    $region247: #{tpu_custom_call.1} parent=1 // pred_fallthru
      _
    // Predicated region
    $region248: #{tpu_custom_call.1} parent=1 // pred_check
      %p385 = pneg %p381
    $region249: #{tpu_custom_call.1} parent=1 // pred_check_branch
      %387 = sbr.rel (%p385) target = $region251
    $region250: #{tpu_custom_call.1} parent=1 // pred_region
      %s388 = sshllo.u32 0, 1
      loop: start=0, step=1, limit=1
      $region252: #{tpu_custom_call.1} parent=250 // loop_pre_header
        _
      $region253: #{tpu_custom_call.1} parent=250 // loop_header
        %s390 = sphi 0, %s394
        %p391 = scmp.ge.s32.totalorder %s390, 1
        %s395 = sphi %s377, %s377
        %s396 = sphi %s378, %s378
      $region254: #{tpu_custom_call.1} parent=250 // loop_header_branch
        %393 = sbr.rel (%p391) target = $region258
      $region255: #{tpu_custom_call.1} parent=250 // loop_body
        %v397 = vld [vmem:[%s395] sm:%s388]
        %398 = vst [vmem:[%s396] sm:%s388] %v397
      $region256: #{tpu_custom_call.1} parent=250 // loop_footer
        %s394 = sadd.s32 1, %s390
      $region257: #{tpu_custom_call.1} parent=250 // loop_footer_branch
        %389 = sbr.rel target = $region253
      $region258: #{tpu_custom_call.1} parent=250 // loop_exit
        _
    $region251: #{tpu_custom_call.1} parent=1 // pred_fallthru
      _
    // Predicated region
    $region270: #{tpu_custom_call.1} parent=1 // pred_check
      _
    $region271: #{tpu_custom_call.1} parent=1 // pred_check_branch
      %422 = sbr.rel (0) target = $region273
    $region272: #{tpu_custom_call.1} parent=1 // pred_region
      %423 = vsyncadd %s379, 16
    $region273: #{tpu_custom_call.1} parent=1 // pred_fallthru
      _
    %s424 = smul.u32 1, 1
    %s425 = sshll.u32 %s424, 4
    %426 = dma.done [#allocation3], %s425
    %s427 = sshll.u32 %s424, 4
    %428 = dma.done %s91, %s427
    %s429 = sshll.u32 %s424, 4
    %430 = dma.done %s139, %s429
    %s431 = sshll.u32 %s424, 4
    %432 = dma.done %s187, %s431
    %s433 = sshll.u32 %s424, 4
    %434 = dma.done %s235, %s433
    %s435 = sshll.u32 %s424, 4
    %436 = dma.done %s283, %s435
    %s437 = sshll.u32 %s424, 4
    %438 = dma.done %s331, %s437
    %s439 = sshll.u32 %s424, 4
    %440 = dma.done %s379, %s439
    %v441 = vld [vmem:[%s3] sm:$0x1]
    %v442 = vld [vmem:[%s3 + $0x1] sm:$0x1]
    %v443 = vld [vmem:[%s1] sm:$0xff]
    %v444 = vcvt.s32.f32 %v443
    %v445 = vld [vmem:[#allocation2] sm:$0xff]
    %v446 = vsub.f32 %v442, %v441
    %448 = vset.pattern.permute.xlu0 0
    %449 = vperm.xlu0 %448, %v444
    %v450 = vpop.permute.xlu0 %449
    %v452 = vlaneseq
    %v453 = vshrl.u32 %v452, 7
    %v454 = vsub.s32 0, %v453
    %v455 = vrot.slane %v446, %v454
    %v456 = vmul.f32 %v450, %v455
    %v457 = vlaneseq
    %v458 = vshrl.u32 %v457, 7
    %v459 = vsub.s32 0, %v458
    %v460 = vrot.slane %v441, %v459
    %v461 = vadd.f32 %v460, %v456
    %v462 = vadd.f32 %v445, %v461
    %v463 = vpack.c.bf16 %v462, %v462
    %v464 = vld [vmem:[%s4] sm:$0xf]
    %v465 = vld [vmem:[%s4 + $0x4] sm:$0xf]
    %v466 = vld [vmem:[%s4 + $0x8] sm:$0xf]
    %v467 = vld [vmem:[%s4 + $0xc] sm:$0xf]
    %v468 = vld [vmem:[%s5] sm:$0x1]
    %v470 = vlaneseq
    %v471 = vshrl.u32 %v470, 7
    %v472 = vsub.s32 0, %v471
    %v473 = vrot.slane %v468, %v472
    %v479 = vunpack.c.l.b16 %v464
    %v480 = vunpack.c.l.b16 %v465
    %v481 = vunpack.c.l.b16 %v466
    %v482 = vunpack.c.l.b16 %v467
    %v483 = vpack.c.b16 %v480, %v479
    %v484 = vpack.c.b16 %v482, %v481
    %vm487 = vcmask 261120
    %v489 = vsel %vm487, %v463, 0
    %491 = vmatprep.subr.bf16.mxu0 0
    %492 = vmatpush1.bf16.msra.mxu0 %v483
    %493 = vmatprep.subr.bf16.mxu0 0
    %494 = vmatpush1.bf16.msra.mxu0 %v484
    %495 = vmatprep.subr.bf16.mxu0 0
    %496 = vmatpush1.bf16.msra.mxu0 0
    %497 = vmatprep.subr.bf16.mxu0 0
    %498 = vmatpush1.bf16.msra.mxu0 0
    %499 = vmatprep.subr.bf16.mxu0 0
    %500 = vmatpush1.bf16.msra.mxu0 0
    %501 = vmatprep.subr.bf16.mxu0 0
    %502 = vmatpush1.bf16.msra.mxu0 0
    %503 = vmatprep.subr.bf16.mxu0 0
    %504 = vmatpush1.bf16.msra.mxu0 0
    %505 = vmatprep.subr.bf16.mxu0 0
    %506 = vmatpush1.bf16.msra.mxu0 0
    %507 = vmatprep.subr.bf16.mxu0 0
    %508 = vmatpush1.bf16.msra.mxu0 0
    %509 = vmatprep.subr.bf16.mxu0 0
    %510 = vmatpush1.bf16.msra.mxu0 0
    %511 = vmatprep.subr.bf16.mxu0 0
    %512 = vmatpush1.bf16.msra.mxu0 0
    %513 = vmatprep.subr.bf16.mxu0 0
    %514 = vmatpush1.bf16.msra.mxu0 0
    %515 = vmatprep.subr.bf16.mxu0 0
    %516 = vmatpush1.bf16.msra.mxu0 0
    %517 = vmatprep.subr.bf16.mxu0 0
    %518 = vmatpush1.bf16.msra.mxu0 0
    %519 = vmatprep.subr.bf16.mxu0 0
    %520 = vmatpush1.bf16.msra.mxu0 0
    %521 = vmatprep.subr.bf16.mxu0 0
    %522 = vmatpush1.bf16.msra.mxu0 0
    %523 = vmatprep.mubr.bf16.mxu0 0
    %524 = vmatmul.mubr.bf16.gmra.mrb[0].mxu0 %v489
    %v525 = vpop.f32.mrb[0].mxu0
    %v526 = vadd.f32 %v473, %v525
    %v527 = vpop.f32.mrb[0].mxu0
    %v528 = vpop.f32.mrb[0].mxu0
    %v529 = vpop.f32.mrb[0].mxu0
    %530 = vdwg.mxu0
    %v531 = vtanh.pop %v526
    %v532 = vpack.c.bf16 %v531, %v531
    %v533 = vld [vmem:[%s6] sm:$0xf]
    %v534 = vld [vmem:[%s6 + $0x4] sm:$0xf]
    %v535 = vld [vmem:[%s6 + $0x8] sm:$0xf]
    %v536 = vld [vmem:[%s6 + $0xc] sm:$0xf]
    %v537 = vld [vmem:[%s7] sm:$0x1]
    %v539 = vlaneseq
    %v540 = vshrl.u32 %v539, 7
    %v541 = vsub.s32 0, %v540
    %v542 = vrot.slane %v537, %v541
    %v548 = vunpack.c.l.b16 %v533
    %v549 = vunpack.c.l.b16 %v534
    %v550 = vunpack.c.l.b16 %v535
    %v551 = vunpack.c.l.b16 %v536
    %v552 = vpack.c.b16 %v549, %v548
    %v553 = vpack.c.b16 %v551, %v550
    %v557 = vsel %vm487, %v532, 0
    %559 = vmatprep.subr.bf16.mxu0 0
    %560 = vmatpush1.bf16.msra.mxu0 %v552
    %561 = vmatprep.subr.bf16.mxu0 0
    %562 = vmatpush1.bf16.msra.mxu0 %v553
    %563 = vmatprep.subr.bf16.mxu0 0
    %564 = vmatpush1.bf16.msra.mxu0 0
    %565 = vmatprep.subr.bf16.mxu0 0
    %566 = vmatpush1.bf16.msra.mxu0 0
    %567 = vmatprep.subr.bf16.mxu0 0
    %568 = vmatpush1.bf16.msra.mxu0 0
    %569 = vmatprep.subr.bf16.mxu0 0
    %570 = vmatpush1.bf16.msra.mxu0 0
    %571 = vmatprep.subr.bf16.mxu0 0
    %572 = vmatpush1.bf16.msra.mxu0 0
    %573 = vmatprep.subr.bf16.mxu0 0
    %574 = vmatpush1.bf16.msra.mxu0 0
    %575 = vmatprep.subr.bf16.mxu0 0
    %576 = vmatpush1.bf16.msra.mxu0 0
    %577 = vmatprep.subr.bf16.mxu0 0
    %578 = vmatpush1.bf16.msra.mxu0 0
    %579 = vmatprep.subr.bf16.mxu0 0
    %580 = vmatpush1.bf16.msra.mxu0 0
    %581 = vmatprep.subr.bf16.mxu0 0
    %582 = vmatpush1.bf16.msra.mxu0 0
    %583 = vmatprep.subr.bf16.mxu0 0
    %584 = vmatpush1.bf16.msra.mxu0 0
    %585 = vmatprep.subr.bf16.mxu0 0
    %586 = vmatpush1.bf16.msra.mxu0 0
    %587 = vmatprep.subr.bf16.mxu0 0
    %588 = vmatpush1.bf16.msra.mxu0 0
    %589 = vmatprep.subr.bf16.mxu0 0
    %590 = vmatpush1.bf16.msra.mxu0 0
    %591 = vmatprep.mubr.bf16.mxu0 0
    %592 = vmatmul.mubr.bf16.gmra.mrb[0].mxu0 %v557
    %v593 = vpop.f32.mrb[0].mxu0
    %v594 = vadd.f32 %v542, %v593
    %v595 = vpop.f32.mrb[0].mxu0
    %v596 = vpop.f32.mrb[0].mxu0
    %v597 = vpop.f32.mrb[0].mxu0
    %598 = vdwg.mxu0
    %599 = vst [vmem:[#allocation7] sm:$0xff] %v594
    // Predicated region
    $region274: #{tpu_custom_call.1} parent=1 // pred_check
      _
    $region275: #{tpu_custom_call.1} parent=1 // pred_check_branch
      %601 = sbr.rel (0) target = $region277
    $region276: #{tpu_custom_call.1} parent=1 // pred_region
      %s603 = ssub.s32 128, 128
      %604 = vsyncadd [#allocation5], %s603
      %s606 = sshll.u32 [#allocation7], 4
      %s607 = int_to_ptr.vmem [resolvable:$true] %s606
      %609 = dma.vmem_to_hbm [thread:$0]  %s607, 128, %s8, [#allocation5]
    $region277: #{tpu_custom_call.1} parent=1 // pred_fallthru
      _
    // Predicated region
    $region278: #{tpu_custom_call.1} parent=1 // pred_check
      _
    $region279: #{tpu_custom_call.1} parent=1 // pred_check_branch
      %611 = sbr.rel (0) target = $region281
    $region280: #{tpu_custom_call.1} parent=1 // pred_region
      %612 = dma.done [#allocation5], 128
    $region281: #{tpu_custom_call.1} parent=1 // pred_fallthru
      _
    %613 = vsyncpa [#allocation5], 1
    %614 = vsyncpa [#allocation6], 1
  %615 = vsyncmov [#allocation3]
  %s616 = vpop.sfrf %615
  %p617 = scmp.eq.s32.totalorder %s616, 0
  %p618 = pneg %p617
  %620 = shalt.err (%p618)
  %s621 = scalar_lea.sflag [#allocation3], 1
  %622 = vsyncmov %s621
  %s623 = vpop.sfrf %622
  %p624 = scmp.eq.s32.totalorder %s623, 0
  %p625 = pneg %p624
  %627 = shalt.err (%p625)
  %s628 = scalar_lea.sflag [#allocation3], 2
  %629 = vsyncmov %s628
  %s630 = vpop.sfrf %629
  %p631 = scmp.eq.s32.totalorder %s630, 0
  %p632 = pneg %p631
  %634 = shalt.err (%p632)
  %s635 = scalar_lea.sflag [#allocation3], 3
  %636 = vsyncmov %s635
  %s637 = vpop.sfrf %636
  %p638 = scmp.eq.s32.totalorder %s637, 0
  %p639 = pneg %p638
  %641 = shalt.err (%p639)
  %s642 = scalar_lea.sflag [#allocation3], 4
  %643 = vsyncmov %s642
  %s644 = vpop.sfrf %643
  %p645 = scmp.eq.s32.totalorder %s644, 0
  %p646 = pneg %p645
  %648 = shalt.err (%p646)
  %s649 = scalar_lea.sflag [#allocation3], 5
  %650 = vsyncmov %s649
  %s651 = vpop.sfrf %650
  %p652 = scmp.eq.s32.totalorder %s651, 0
  %p653 = pneg %p652
  %655 = shalt.err (%p653)
  %s656 = scalar_lea.sflag [#allocation3], 6
  %657 = vsyncmov %s656
  %s658 = vpop.sfrf %657
  %p659 = scmp.eq.s32.totalorder %s658, 0
  %p660 = pneg %p659
  %662 = shalt.err (%p660)
  %s663 = scalar_lea.sflag [#allocation3], 7
  %664 = vsyncmov %s663
  %s665 = vpop.sfrf %664
  %p666 = scmp.eq.s32.totalorder %s665, 0
  %p667 = pneg %p666
  %669 = shalt.err (%p667)

</llo_original>
